<compile_context>
chip_gen: v5e
topology: v5e:2x2
jax: 0.10.0
libtpu: 0.0.40
codegen_flags: <defaults>
</compile_context>

<pallas_src>
import functools

import jax
import jax.numpy as jnp
from jax.experimental import pallas as pl
from jax.experimental.pallas import tpu as pltpu


def _down_kernel(x_ref, w_ref, b_ref, o_ref, *, Ho, Wo):
    # x_ref: (1, Ho+1, Wo+1, 4*Cin) padded space-to-depth input slab for one image
    # w_ref: (2, 2, 4*Cin, Cout_p) rearranged conv weight with BN scale folded in
    # b_ref: (1, Cout_p) folded conv-bias + BN affine
    # o_ref: (1, Ho*Wo, Cout_p) output pixels for this image (lane-dense, Cout_p % 128 == 0)
    M = Ho * Wo
    C4 = x_ref.shape[-1]
    Cp = o_ref.shape[-1]

    # Accumulator starts at the folded bias (saves a separate bias-add pass over the slab).
    acc = jnp.broadcast_to(b_ref[...], (M, Cp)).astype(jnp.float32)
    # 3x3 stride-2 conv == 2x2 stride-1 conv over the s2d slab: 4 unit-stride taps, 4 MXU dots.
    for a in range(2):
        for b in range(2):
            tap = x_ref[0, a:a + Ho, b:b + Wo, :].reshape(M, C4)
            acc = acc + jnp.dot(tap, w_ref[a, b], preferred_element_type=jnp.float32)

    y = jnp.maximum(acc, 0.01 * acc)          # LeakyReLU (PyTorch default slope 0.01)
    o_ref[0] = y.astype(o_ref.dtype)


@functools.partial(jax.jit, static_argnames=("eps",))
def down_forward(x_nchw, w, b_conv, gamma, beta, r_mean, r_var, eps=1e-5):
    """Forward pass of Down.  x_nchw: (N, Cin, H, W) -> (N, 2*Cin, ceil(H/2), ceil(W/2))."""
    N, Cin, H, W = x_nchw.shape
    Cout = w.shape[0]
    Ho, Wo = (H + 1) // 2, (W + 1) // 2
    He, We = 2 * Ho, 2 * Wo
    C4 = 4 * Cin
    M = Ho * Wo
    LANE = 128
    Cout_p = ((Cout + LANE - 1) // LANE) * LANE
    itemsize = jnp.dtype(x_nchw.dtype).itemsize

    # ---- glue: space-to-depth relayout (single pass over the input, replaces HBM im2col) ----
    xp = x_nchw
    if (He, We) != (H, W):  # odd spatial dims: bottom/right zero pad == the conv's implicit pad
        xp = jnp.pad(xp, ((0, 0), (0, 0), (0, He - H), (0, We - W)))
    # xs[n, i, j, s*2*Cin + t*Cin + ci] = x[n, ci, 2i+s, 2j+t]
    xs = xp.reshape(N, Cin, Ho, 2, Wo, 2)
    xs = jnp.transpose(xs, (0, 2, 4, 3, 5, 1)).reshape(N, Ho, Wo, C4)
    # Only the top/left halo of the original pad=1 is ever read by the 2x2 formulation.
    xs = jnp.pad(xs, ((0, 0), (1, 0), (1, 0), (0, 0)))          # (N, Ho+1, Wo+1, C4)

    # ---- glue: weight rearrangement + BN folding (tiny, reused across the whole grid) ----
    scale = gamma / jnp.sqrt(r_var + eps)                        # (Cout,)
    bias = (b_conv - r_mean) * scale + beta                      # (Cout,)
    wt = jnp.transpose(w, (2, 3, 1, 0)) * scale[None, None, None, :]   # (3,3,Cin,Cout), scaled
    wt = jnp.pad(wt, ((0, 1), (0, 1), (0, 0), (0, Cout_p - Cout)))     # zero tap + lane pad
    # (a, s) / (b, t) -> kh / kw ; index 3 selects the all-zero tap (unused s2d sub-position).
    sel = jnp.array([[3, 0], [1, 2]], dtype=jnp.int32)
    w_taps = wt[sel[:, None, :, None], sel[None, :, None, :]]    # (2, 2, 2, 2, Cin, Cout_p)
    w_taps = w_taps.reshape(2, 2, C4, Cout_p)
    bias_p = jnp.pad(bias, (0, Cout_p - Cout)).reshape(1, Cout_p)

    # ---- explicit VMEM budget (double-buffered in/out blocks + resident weights) ----
    in_block = (Ho + 1) * (Wo + 1) * C4 * itemsize
    out_block = M * Cout_p * itemsize
    w_bytes = 2 * 2 * C4 * Cout_p * 4 + Cout_p * 4
    vmem_need = 2 * (in_block + out_block) + 2 * w_bytes
    vmem_limit = int(min(48 * 2 ** 20, max(32 * 2 ** 20, 2 * vmem_need)))

    out = pl.pallas_call(
        functools.partial(_down_kernel, Ho=Ho, Wo=Wo),
        out_shape=jax.ShapeDtypeStruct((N, M, Cout_p), x_nchw.dtype),
        grid=(N,),
        in_specs=[
            pl.BlockSpec((1, Ho + 1, Wo + 1, C4), lambda i: (i, 0, 0, 0)),
            pl.BlockSpec((2, 2, C4, Cout_p), lambda i: (0, 0, 0, 0)),
            pl.BlockSpec((1, Cout_p), lambda i: (0, 0)),
        ],
        out_specs=pl.BlockSpec((1, M, Cout_p), lambda i: (i, 0, 0)),
        compiler_params=pltpu.CompilerParams(
            dimension_semantics=("parallel",),
            vmem_limit_bytes=vmem_limit,
        ),
    )(xs, w_taps, bias_p)

    # Rows are already NHWC-flat per image; slice off the lane padding and go back to NCHW.
    out = out[:, :, :Cout].reshape(N, Ho, Wo, Cout)
    return jnp.transpose(out, (0, 3, 1, 2))


def reference_forward(x_nchw, w, b_conv, gamma, beta, r_mean, r_var, eps=1e-5):
    y = jax.lax.conv_general_dilated(
        x_nchw, w, window_strides=(2, 2), padding=((1, 1), (1, 1)),
        dimension_numbers=("NCHW", "OIHW", "NCHW"))
    y = y + b_conv[None, :, None, None]
    y = (y - r_mean[None, :, None, None]) / jnp.sqrt(r_var + eps)[None, :, None, None]
    y = y * gamma[None, :, None, None] + beta[None, :, None, None]
    return jnp.where(y > 0, y, 0.01 * y)


if __name__ == "__main__":
    # Small shapes consistent with the module: batch=2, C=4, H=W=16
    N, C, H, W = 2, 4, 16, 16
    Cout = 2 * C

    key = jax.random.PRNGKey(0)
    kx, kw, kb, kg, kbt, km, kv = jax.random.split(key, 7)

    x = jax.random.normal(kx, (N, C, H, W), dtype=jnp.float32)

    # Conv2d(C, 2C, 3) parameters (deterministic synthetic init)
    w = 0.1 * jax.random.normal(kw, (Cout, C, 3, 3), dtype=jnp.float32)
    b_conv = 0.1 * jax.random.normal(kb, (Cout,), dtype=jnp.float32)

    # BatchNorm2d(2C) parameters + running stats (inference semantics)
    gamma = 1.0 + 0.1 * jax.random.normal(kg, (Cout,), dtype=jnp.float32)
    beta = 0.1 * jax.random.normal(kbt, (Cout,), dtype=jnp.float32)
    r_mean = 0.1 * jax.random.normal(km, (Cout,), dtype=jnp.float32)
    r_var = jax.random.uniform(kv, (Cout,), minval=0.5, maxval=1.5, dtype=jnp.float32)

    out = down_forward(x, w, b_conv, gamma, beta, r_mean, r_var)
    out = jax.block_until_ready(out)

    ref = reference_forward(x, w, b_conv, gamma, beta, r_mean, r_var)
    assert out.shape == (N, Cout, H // 2, W // 2)
    assert jnp.allclose(out, ref, rtol=1e-4, atol=1e-4)

    print("KERNEL_OK")
</pallas_src>

<mosaic_0001>
module attributes {stable_mosaic.version = 11 : i64} {
  func.func @_down_kernel(%arg0: i32, %arg1: memref<1x9x9x16xf32, #tpu.memory_space<vmem>>, %arg2: memref<2x2x16x128xf32, #tpu.memory_space<vmem>>, %arg3: memref<1x128xf32, #tpu.memory_space<vmem>>, %arg4: memref<1x64x128xf32, #tpu.memory_space<vmem>>) attributes {dimension_semantics = [#tpu.dimension_semantics<parallel>], iteration_bounds = array<i64: 2>, scalar_prefetch = 0 : i64, scratch_operands = 0 : i64, tpu.core_type = #tpu.core_type<tc>, window_params = [{transform_indices = @transform_0, window_bounds = array<i64: 1, 9, 9, 16>}, {pipeline_mode = #tpu.pipeline_mode<synchronous>, transform_indices = @transform_1, window_bounds = array<i64: 2, 2, 16, 128>}, {pipeline_mode = #tpu.pipeline_mode<synchronous>, transform_indices = @transform_2, window_bounds = array<i64: 1, 128>}, {transform_indices = @transform_3, window_bounds = array<i64: 1, 64, 128>}]} {
    %c0 = arith.constant 0 : index
    %c0_0 = arith.constant 0 : index
    %0 = vector.load %arg3[%c0, %c0_0] : memref<1x128xf32, #tpu.memory_space<vmem>>, vector<1x128xf32>
    %1 = vector.shape_cast %0 : vector<1x128xf32> to vector<1x128xf32>
    %2 = vector.broadcast %1 : vector<1x128xf32> to vector<64x128xf32>
    %c0_1 = arith.constant 0 : index
    %c0_2 = arith.constant 0 : index
    %c0_3 = arith.constant 0 : index
    %c0_4 = arith.constant 0 : index
    %3 = vector.load %arg1[%c0_1, %c0_2, %c0_3, %c0_4] : memref<1x9x9x16xf32, #tpu.memory_space<vmem>>, vector<1x8x8x16xf32>
    %4 = vector.shape_cast %3 : vector<1x8x8x16xf32> to vector<8x8x16xf32>
    %5 = vector.shape_cast %4 : vector<8x8x16xf32> to vector<64x16xf32>
    %c0_5 = arith.constant 0 : index
    %c0_6 = arith.constant 0 : index
    %c0_7 = arith.constant 0 : index
    %c0_8 = arith.constant 0 : index
    %6 = vector.load %arg2[%c0_5, %c0_6, %c0_7, %c0_8] : memref<2x2x16x128xf32, #tpu.memory_space<vmem>>, vector<1x1x16x128xf32>
    %7 = vector.shape_cast %6 : vector<1x1x16x128xf32> to vector<16x128xf32>
    %cst = arith.constant dense<0.000000e+00> : vector<64x128xf32>
    %8 = tpu.matmul %5, %7, %cst {dimension_numbers = #tpu.dot_dimension_numbers<[1], [0], [0], [1], [0, 0, 1, 1], [], []>} : vector<64x16xf32>, vector<16x128xf32>, vector<64x128xf32> -> vector<64x128xf32>
    %9 = arith.addf %2, %8 : vector<64x128xf32>
    %c0_9 = arith.constant 0 : index
    %c0_10 = arith.constant 0 : index
    %c1 = arith.constant 1 : index
    %c0_11 = arith.constant 0 : index
    %10 = vector.load %arg1[%c0_9, %c0_10, %c1, %c0_11] : memref<1x9x9x16xf32, #tpu.memory_space<vmem>>, vector<1x8x8x16xf32>
    %11 = vector.shape_cast %10 : vector<1x8x8x16xf32> to vector<8x8x16xf32>
    %12 = vector.shape_cast %11 : vector<8x8x16xf32> to vector<64x16xf32>
    %c0_12 = arith.constant 0 : index
    %c1_13 = arith.constant 1 : index
    %c0_14 = arith.constant 0 : index
    %c0_15 = arith.constant 0 : index
    %13 = vector.load %arg2[%c0_12, %c1_13, %c0_14, %c0_15] : memref<2x2x16x128xf32, #tpu.memory_space<vmem>>, vector<1x1x16x128xf32>
    %14 = vector.shape_cast %13 : vector<1x1x16x128xf32> to vector<16x128xf32>
    %cst_16 = arith.constant dense<0.000000e+00> : vector<64x128xf32>
    %15 = tpu.matmul %12, %14, %cst_16 {dimension_numbers = #tpu.dot_dimension_numbers<[1], [0], [0], [1], [0, 0, 1, 1], [], []>} : vector<64x16xf32>, vector<16x128xf32>, vector<64x128xf32> -> vector<64x128xf32>
    %16 = arith.addf %9, %15 : vector<64x128xf32>
    %c0_17 = arith.constant 0 : index
    %c1_18 = arith.constant 1 : index
    %c0_19 = arith.constant 0 : index
    %c0_20 = arith.constant 0 : index
    %17 = vector.load %arg1[%c0_17, %c1_18, %c0_19, %c0_20] : memref<1x9x9x16xf32, #tpu.memory_space<vmem>>, vector<1x8x8x16xf32>
    %18 = vector.shape_cast %17 : vector<1x8x8x16xf32> to vector<8x8x16xf32>
    %19 = vector.shape_cast %18 : vector<8x8x16xf32> to vector<64x16xf32>
    %c1_21 = arith.constant 1 : index
    %c0_22 = arith.constant 0 : index
    %c0_23 = arith.constant 0 : index
    %c0_24 = arith.constant 0 : index
    %20 = vector.load %arg2[%c1_21, %c0_22, %c0_23, %c0_24] : memref<2x2x16x128xf32, #tpu.memory_space<vmem>>, vector<1x1x16x128xf32>
    %21 = vector.shape_cast %20 : vector<1x1x16x128xf32> to vector<16x128xf32>
    %cst_25 = arith.constant dense<0.000000e+00> : vector<64x128xf32>
    %22 = tpu.matmul %19, %21, %cst_25 {dimension_numbers = #tpu.dot_dimension_numbers<[1], [0], [0], [1], [0, 0, 1, 1], [], []>} : vector<64x16xf32>, vector<16x128xf32>, vector<64x128xf32> -> vector<64x128xf32>
    %23 = arith.addf %16, %22 : vector<64x128xf32>
    %c0_26 = arith.constant 0 : index
    %c1_27 = arith.constant 1 : index
    %c1_28 = arith.constant 1 : index
    %c0_29 = arith.constant 0 : index
    %24 = vector.load %arg1[%c0_26, %c1_27, %c1_28, %c0_29] : memref<1x9x9x16xf32, #tpu.memory_space<vmem>>, vector<1x8x8x16xf32>
    %25 = vector.shape_cast %24 : vector<1x8x8x16xf32> to vector<8x8x16xf32>
    %26 = vector.shape_cast %25 : vector<8x8x16xf32> to vector<64x16xf32>
    %c1_30 = arith.constant 1 : index
    %c1_31 = arith.constant 1 : index
    %c0_32 = arith.constant 0 : index
    %c0_33 = arith.constant 0 : index
    %27 = vector.load %arg2[%c1_30, %c1_31, %c0_32, %c0_33] : memref<2x2x16x128xf32, #tpu.memory_space<vmem>>, vector<1x1x16x128xf32>
    %28 = vector.shape_cast %27 : vector<1x1x16x128xf32> to vector<16x128xf32>
    %cst_34 = arith.constant dense<0.000000e+00> : vector<64x128xf32>
    %29 = tpu.matmul %26, %28, %cst_34 {dimension_numbers = #tpu.dot_dimension_numbers<[1], [0], [0], [1], [0, 0, 1, 1], [], []>} : vector<64x16xf32>, vector<16x128xf32>, vector<64x128xf32> -> vector<64x128xf32>
    %30 = arith.addf %23, %29 : vector<64x128xf32>
    %cst_35 = arith.constant 0.00999999977 : f32
    %31 = vector.broadcast %cst_35 : f32 to vector<64x128xf32>
    %32 = arith.mulf %31, %30 : vector<64x128xf32>
    %33 = arith.maximumf %30, %32 : vector<64x128xf32>
    %c0_36 = arith.constant 0 : index
    %c0_37 = arith.constant 0 : index
    %c0_38 = arith.constant 0 : index
    %34 = vector.load %arg4[%c0_36, %c0_37, %c0_38] : memref<1x64x128xf32, #tpu.memory_space<vmem>>, vector<1x64x128xf32>
    %35 = vector.shape_cast %34 : vector<1x64x128xf32> to vector<64x128xf32>
    %36 = vector.shape_cast %33 : vector<64x128xf32> to vector<1x64x128xf32>
    tpu.vector_store %arg4[%c0_36, %c0_37, %c0_38], %36 {strides = array<i32>} : memref<1x64x128xf32, #tpu.memory_space<vmem>>, vector<1x64x128xf32>,
    return
  }
  func.func @transform_0(%arg0: i32) -> (i32, i32, i32, i32) {
    %c0_i32 = arith.constant 0 : i32
    %c0_i32_0 = arith.constant 0 : i32
    %c0_i32_1 = arith.constant 0 : i32
    %c0_i32_2 = arith.constant 0 : i32
    return %arg0, %c0_i32, %c0_i32_0, %c0_i32_1 : i32, i32, i32, i32
  }
  func.func @transform_1(%arg0: i32) -> (i32, i32, i32, i32) {
    %c0_i32 = arith.constant 0 : i32
    %c0_i32_0 = arith.constant 0 : i32
    %c0_i32_1 = arith.constant 0 : i32
    %c0_i32_2 = arith.constant 0 : i32
    %c0_i32_3 = arith.constant 0 : i32
    return %c0_i32, %c0_i32_0, %c0_i32_1, %c0_i32_2 : i32, i32, i32, i32
  }
  func.func @transform_2(%arg0: i32) -> (i32, i32) {
    %c0_i32 = arith.constant 0 : i32
    %c0_i32_0 = arith.constant 0 : i32
    %c0_i32_1 = arith.constant 0 : i32
    return %c0_i32, %c0_i32_0 : i32, i32
  }
  func.func @transform_3(%arg0: i32) -> (i32, i32, i32) {
    %c0_i32 = arith.constant 0 : i32
    %c0_i32_0 = arith.constant 0 : i32
    %c0_i32_1 = arith.constant 0 : i32
    return %arg0, %c0_i32, %c0_i32_0 : i32, i32, i32
  }
}

</mosaic_0001>

<llo_original>
// kernel: down_forward.1
$region0: #{down_forward.1}
  #allocation0 [shape = 'u32[]', space=smem, size = 0x4, offset = 0x4, fixed_abs, tag = 'smem constant byte address 0x4 - core index']
  #allocation1 [shape = 'u32[72,128]{1,0:T(1,128)}', space=vmem, size = 0x9000, scoped, tag = 'internal scratch']
  %s0 = inlined_call_operand.vmem [shape: f32[2,9,9,16], index: 0, kind: input, shape index: {}]
  %s1 = inlined_call_operand.vmem [shape: f32[2,2,16,128], index: 1, kind: input, shape index: {}]
  %s2 = inlined_call_operand.vmem [shape: f32[1,128], index: 2, kind: input, shape index: {}]
  %s3 = inlined_call_operand.vmem [shape: f32[2,64,128], index: 3, kind: output, shape index: {}]
  %s4 = sld [smem:[#allocation0]]
  $region45: #{down_forward.1} parent=0
    _
  %s6 = ssub.s32 1, %s4
  %s7 = scalar_select 0, %s6, %s4
  loop: start=0, step=1, limit=4
  $region2: #{down_forward.1} parent=0 // loop_pre_header
    _
  $region3: #{down_forward.1} parent=0 // loop_header
    %s9 = sphi 0, %s13
    %p10 = scmp.ge.s32.totalorder %s9, 4
    %s19 = sphi 0, %s21
    %s22 = sphi 0, %s19
    %s23 = sphi 0, %s22
    %s39 = sphi 0, %s23
    %s43 = sphi 0, %s43
    %s45 = sphi 0, %s43
    %s46 = sphi 0, %s45
    %s60 = sphi 0, %s46
    %s64 = sphi 0, %s64
    %s66 = sphi 0, %s64
    %s67 = sphi 0, %s66
    %s81 = sphi 0, %s67
    %s87 = sphi 0, %s89
    %s90 = sphi 0, %s87
    %s91 = sphi 0, %s90
    %s107 = sphi 0, %s91
  $region4: #{down_forward.1} parent=0 // loop_header_branch
    %12 = sbr.rel (%p10) target = $region8
  $region5: #{down_forward.1} parent=0 // loop_body
    %s14 = ssub.s32 %s9, 1
    %s15 = ssub.s32 %s9, 2
    %s16 = sadd.s32 %s9, 1
    %s17 = ssub.s32 %s9, %s16
    %p18 = scmp.eq.s32.totalorder %s17, 0
    %s20 = sadd.s32 %s19, 1
    %s21 = scalar_select %p18, %s19, %s20
    %p24 = pneg %p18
    %p25 = scmp.eq.s32.totalorder %s9, 1
    %p26 = por %p24, %p25
    %p27 = scmp.ne.s32.totalorder %s19, %s22
    %p28 = scmp.eq.s32.totalorder %s9, 0
    %p29 = por %p27, %p28
    %p30 = scmp.ne.s32.totalorder %s19, %s22
    %p31 = scmp.eq.s32.totalorder %s14, 1
    %p32 = por %p30, %p31
    %p33 = scmp.ne.s32.totalorder %s22, %s23
    %p34 = scmp.eq.s32.totalorder %s14, 0
    %p35 = por %p33, %p34
    %p36 = scmp.ne.s32.totalorder %s22, %s23
    %p37 = scmp.eq.s32.totalorder %s15, 1
    %p38 = por %p36, %p37
    %p40 = scmp.ne.s32.totalorder %s23, %s39
    %p41 = scmp.eq.s32.totalorder %s15, 0
    %p42 = por %p40, %p41
    %s44 = sadd.s32 %s43, 1
    %p47 = scmp.eq.s32.totalorder %s9, 1
    %p48 = scmp.ne.s32.totalorder %s43, %s45
    %p49 = scmp.eq.s32.totalorder %s9, 0
    %p50 = por %p48, %p49
    %p51 = scmp.ne.s32.totalorder %s43, %s45
    %p52 = scmp.eq.s32.totalorder %s14, 1
    %p53 = por %p51, %p52
    %p54 = scmp.ne.s32.totalorder %s45, %s46
    %p55 = scmp.eq.s32.totalorder %s14, 0
    %p56 = por %p54, %p55
    %p57 = scmp.ne.s32.totalorder %s45, %s46
    %p58 = scmp.eq.s32.totalorder %s15, 1
    %p59 = por %p57, %p58
    %p61 = scmp.ne.s32.totalorder %s46, %s60
    %p62 = scmp.eq.s32.totalorder %s15, 0
    %p63 = por %p61, %p62
    %s65 = sadd.s32 %s64, 1
    %p68 = scmp.eq.s32.totalorder %s9, 1
    %p69 = scmp.ne.s32.totalorder %s64, %s66
    %p70 = scmp.eq.s32.totalorder %s9, 0
    %p71 = por %p69, %p70
    %p72 = scmp.ne.s32.totalorder %s64, %s66
    %p73 = scmp.eq.s32.totalorder %s14, 1
    %p74 = por %p72, %p73
    %p75 = scmp.ne.s32.totalorder %s66, %s67
    %p76 = scmp.eq.s32.totalorder %s14, 0
    %p77 = por %p75, %p76
    %p78 = scmp.ne.s32.totalorder %s66, %s67
    %p79 = scmp.eq.s32.totalorder %s15, 1
    %p80 = por %p78, %p79
    %p82 = scmp.ne.s32.totalorder %s67, %s81
    %p83 = scmp.eq.s32.totalorder %s15, 0
    %p84 = por %p82, %p83
    %s85 = ssub.s32 %s9, %s16
    %p86 = scmp.eq.s32.totalorder %s85, 0
    %s88 = sadd.s32 %s87, 1
    %s89 = scalar_select %p86, %s87, %s88
    %p92 = pneg %p86
    %p93 = scmp.eq.s32.totalorder %s9, 1
    %p94 = por %p92, %p93
    %p95 = scmp.ne.s32.totalorder %s87, %s90
    %p96 = scmp.eq.s32.totalorder %s9, 0
    %p97 = por %p95, %p96
    %p98 = scmp.ne.s32.totalorder %s87, %s90
    %p99 = scmp.eq.s32.totalorder %s14, 1
    %p100 = por %p98, %p99
    %p101 = scmp.ne.s32.totalorder %s90, %s91
    %p102 = scmp.eq.s32.totalorder %s14, 0
    %p103 = por %p101, %p102
    %p104 = scmp.ne.s32.totalorder %s90, %s91
    %p105 = scmp.eq.s32.totalorder %s15, 1
    %p106 = por %p104, %p105
    %p108 = scmp.ne.s32.totalorder %s91, %s107
    %p109 = scmp.eq.s32.totalorder %s15, 0
    %p110 = por %p108, %p109
    %p111 = scmp.le.s32.totalorder 1, %s9
    %p112 = scmp.lt.s32.totalorder %s9, 3
    %p113 = pnand %p111, %p112
    %p114 = pneg %p113
    // Predicated region
    $region9: #{down_forward.1} parent=5 // pred_check
      _
    $region10: #{down_forward.1} parent=5 // pred_check_branch
      %116 = sbr.rel (%p113) target = $region12
    $region11: #{down_forward.1} parent=5 // pred_region
      %s117 = ssub.s32 %s9, 1
      // Predicated region
      $region13: #{down_forward.1} parent=11 // pred_check
        %p118 = pneg %p56
      $region14: #{down_forward.1} parent=11 // pred_check_branch
        %120 = sbr.rel (%p118) target = $region16
      $region15: #{down_forward.1} parent=11 // pred_region
        _
      $region16: #{down_forward.1} parent=11 // pred_fallthru
        _
      // Predicated region
      $region17: #{down_forward.1} parent=11 // pred_check
        %p121 = pneg %p77
      $region18: #{down_forward.1} parent=11 // pred_check_branch
        %123 = sbr.rel (%p121) target = $region20
      $region19: #{down_forward.1} parent=11 // pred_region
        _
      $region20: #{down_forward.1} parent=11 // pred_fallthru
        _
    $region12: #{down_forward.1} parent=5 // pred_fallthru
      _
    %p124 = scmp.lt.s32.totalorder %s9, 2
    // Predicated region
    $region21: #{down_forward.1} parent=5 // pred_check
      %p125 = pneg %p124
    $region22: #{down_forward.1} parent=5 // pred_check_branch
      %127 = sbr.rel (%p125) target = $region24
    $region23: #{down_forward.1} parent=5 // pred_region
      // Predicated region
      $region25: #{down_forward.1} parent=23 // pred_check
        %p128 = pneg %p29
      $region26: #{down_forward.1} parent=23 // pred_check_branch
        %130 = sbr.rel (%p128) target = $region28
      $region27: #{down_forward.1} parent=23 // pred_region
        %p131 = scmp.lt.s32.totalorder %s9, 1
        %s132 = scalar_select %p131, %s9, 1
        %s133 = smul.addr %s132, 18
        %s134 = smul.addr %s133, 8
        %s135 = scalar_lea.vmem %s0, %s134
      $region28: #{down_forward.1} parent=23 // pred_fallthru
        _
    $region24: #{down_forward.1} parent=5 // pred_fallthru
      _
    %p136 = scmp.le.s32.totalorder 1, %s9
    %p137 = scmp.lt.s32.totalorder %s9, 3
    %p138 = pnand %p136, %p137
    %p139 = pneg %p138
    // Predicated region
    $region29: #{down_forward.1} parent=5 // pred_check
      _
    $region30: #{down_forward.1} parent=5 // pred_check_branch
      %141 = sbr.rel (%p138) target = $region32
    $region31: #{down_forward.1} parent=5 // pred_region
      %s142 = ssub.s32 %s9, 1
      %p143 = scmp.lt.s32.totalorder %s14, 1
      %s144 = scalar_select %p143, %s14, 1
      %s145 = smul.addr %s144, 18
      %s146 = smul.addr %s145, 8
      %s147 = scalar_lea.vmem %s0, %s146
      %p148 = pneg %p35
      %p149 = pneg %p32
      %p150 = pneg %p56
      %p151 = pneg %p53
      %p152 = pneg %p77
      %p153 = pneg %p74
      %p154 = pneg %p103
      %p155 = pneg %p100
      %p156 = scmp.lt.s32.totalorder %s14, 1
      %s157 = scalar_select %p156, %s14, 1
      %s158 = smul.addr %s157, 8
      %s159 = smul.addr %s158, 8
      %s160 = scalar_lea.vmem %s3, %s159
      %p161 = scmp.lt.s32.totalorder %s14, 1
      %s162 = scalar_select %p161, %s14, 1
      %s163 = smul.addr %s162, 18
      %s164 = smul.addr %s163, 8
      %s165 = scalar_lea.vmem %s0, %s164
      %p166 = scmp.lt.s32.totalorder %s14, 1
      %s167 = scalar_select %p166, %s14, 1
      %s168 = smul.addr %s167, 8
      %s169 = smul.addr %s168, 8
      %s170 = scalar_lea.vmem %s3, %s169
      %v171 = vld [vmem:[%s2] sm:$0x1]
      %v173 = vperm.slane %v171, 0
      %v175 = vld [vmem:[%s165] sm:$0xff]
      %v176 = vld [vmem:[%s165 + $0x10] sm:$0xff]
      %v177 = vld [vmem:[%s165 + $0x20] sm:$0xff]
      %v178 = vld [vmem:[%s165 + $0x30] sm:$0xff]
      %v179 = vld [vmem:[%s165 + $0x40] sm:$0xff]
      %v180 = vld [vmem:[%s165 + $0x50] sm:$0xff]
      %v181 = vld [vmem:[%s165 + $0x60] sm:$0xff]
      %v182 = vld [vmem:[%s165 + $0x70] sm:$0xff]
      %v183 = vld [vmem:[%s1] sm:$0xff]
      %v184 = vld [vmem:[%s1 + $0x8] sm:$0xff]
      %vm185 = vcmask 130048
      %v187 = vsel %vm185, %v175, 0
      %v190 = vsel %vm185, %v176, 0
      %v193 = vsel %vm185, %v177, 0
      %v196 = vsel %vm185, %v178, 0
      %v199 = vsel %vm185, %v179, 0
      %v202 = vsel %vm185, %v180, 0
      %v205 = vsel %vm185, %v181, 0
      %v208 = vsel %vm185, %v182, 0
      %210 = vmatpush.msra.mxu0 0.0
      %211 = vmatpush.msra.mxu0 0.0
      %212 = vmatpush.msra.mxu0 0.0
      %213 = vmatpush.msra.mxu0 0.0
      %214 = vmatpush.msra.mxu0 0.0
      %215 = vmatpush.msra.mxu0 0.0
      %216 = vmatpush.msra.mxu0 0.0
      %217 = vmatpush.msra.mxu0 0.0
      %218 = vmatpush.msra.mxu0 0.0
      %219 = vmatpush.msra.mxu0 0.0
      %220 = vmatpush.msra.mxu0 0.0
      %221 = vmatpush.msra.mxu0 0.0
      %222 = vmatpush.msra.mxu0 0.0
      %223 = vmatpush.msra.mxu0 0.0
      %224 = vmatpush.msra.mxu0 %v184
      %225 = vmatpush.msra.mxu0 %v183
      %226 = vmatmul.f32.gmra.mxu0 %v187
      %v227 = vpop.f32.mrf.mxu0
      %v228 = vadd.f32 0.0, %v227
      %229 = vmatmul.f32.gmra.mxu0 %v190
      %v230 = vpop.f32.mrf.mxu0
      %v231 = vadd.f32 0.0, %v230
      %232 = vmatmul.f32.gmra.mxu0 %v193
      %v233 = vpop.f32.mrf.mxu0
      %v234 = vadd.f32 0.0, %v233
      %235 = vmatmul.f32.gmra.mxu0 %v196
      %v236 = vpop.f32.mrf.mxu0
      %v237 = vadd.f32 0.0, %v236
      %238 = vmatmul.f32.gmra.mxu0 %v199
      %v239 = vpop.f32.mrf.mxu0
      %v240 = vadd.f32 0.0, %v239
      %241 = vmatmul.f32.gmra.mxu0 %v202
      %v242 = vpop.f32.mrf.mxu0
      %v243 = vadd.f32 0.0, %v242
      %244 = vmatmul.f32.gmra.mxu0 %v205
      %v245 = vpop.f32.mrf.mxu0
      %v246 = vadd.f32 0.0, %v245
      %247 = vmatmul.f32.gmra.mxu0 %v208
      %v248 = vpop.f32.mrf.mxu0
      %v249 = vadd.f32 0.0, %v248
      %250 = vdwg.mxu0
      %v251 = vadd.f32 %v173, %v228
      %v252 = vadd.f32 %v173, %v231
      %v253 = vadd.f32 %v173, %v234
      %v254 = vadd.f32 %v173, %v237
      %v255 = vadd.f32 %v173, %v240
      %v256 = vadd.f32 %v173, %v243
      %v257 = vadd.f32 %v173, %v246
      %v258 = vadd.f32 %v173, %v249
      %v259 = vld [vmem:[%s165 + $0x1] sm:$0xff]
      %v260 = vld [vmem:[%s165 + $0x11] sm:$0xff]
      %v261 = vld [vmem:[%s165 + $0x21] sm:$0xff]
      %v262 = vld [vmem:[%s165 + $0x31] sm:$0xff]
      %v263 = vld [vmem:[%s165 + $0x41] sm:$0xff]
      %v264 = vld [vmem:[%s165 + $0x51] sm:$0xff]
      %v265 = vld [vmem:[%s165 + $0x61] sm:$0xff]
      %v266 = vld [vmem:[%s165 + $0x71] sm:$0xff]
      %s267 = scalar_lea.vmem %s1, 16
      %v268 = vld [vmem:[%s267] sm:$0xff]
      %v269 = vld [vmem:[%s267 + $0x8] sm:$0xff]
      %v271 = vsel %vm185, %v259, 0
      %v274 = vsel %vm185, %v260, 0
      %v277 = vsel %vm185, %v261, 0
      %v280 = vsel %vm185, %v262, 0
      %v283 = vsel %vm185, %v263, 0
      %v286 = vsel %vm185, %v264, 0
      %v289 = vsel %vm185, %v265, 0
      %v292 = vsel %vm185, %v266, 0
      %294 = vmatpush.msra.mxu0 0.0
      %295 = vmatpush.msra.mxu0 0.0
      %296 = vmatpush.msra.mxu0 0.0
      %297 = vmatpush.msra.mxu0 0.0
      %298 = vmatpush.msra.mxu0 0.0
      %299 = vmatpush.msra.mxu0 0.0
      %300 = vmatpush.msra.mxu0 0.0
      %301 = vmatpush.msra.mxu0 0.0
      %302 = vmatpush.msra.mxu0 0.0
      %303 = vmatpush.msra.mxu0 0.0
      %304 = vmatpush.msra.mxu0 0.0
      %305 = vmatpush.msra.mxu0 0.0
      %306 = vmatpush.msra.mxu0 0.0
      %307 = vmatpush.msra.mxu0 0.0
      %308 = vmatpush.msra.mxu0 %v269
      %309 = vmatpush.msra.mxu0 %v268
      %310 = vmatmul.f32.gmra.mxu0 %v271
      %v311 = vpop.f32.mrf.mxu0
      %v312 = vadd.f32 0.0, %v311
      %313 = vmatmul.f32.gmra.mxu0 %v274
      %v314 = vpop.f32.mrf.mxu0
      %v315 = vadd.f32 0.0, %v314
      %316 = vmatmul.f32.gmra.mxu0 %v277
      %v317 = vpop.f32.mrf.mxu0
      %v318 = vadd.f32 0.0, %v317
      %319 = vmatmul.f32.gmra.mxu0 %v280
      %v320 = vpop.f32.mrf.mxu0
      %v321 = vadd.f32 0.0, %v320
      %322 = vmatmul.f32.gmra.mxu0 %v283
      %v323 = vpop.f32.mrf.mxu0
      %v324 = vadd.f32 0.0, %v323
      %325 = vmatmul.f32.gmra.mxu0 %v286
      %v326 = vpop.f32.mrf.mxu0
      %v327 = vadd.f32 0.0, %v326
      %328 = vmatmul.f32.gmra.mxu0 %v289
      %v329 = vpop.f32.mrf.mxu0
      %v330 = vadd.f32 0.0, %v329
      %331 = vmatmul.f32.gmra.mxu0 %v292
      %v332 = vpop.f32.mrf.mxu0
      %v333 = vadd.f32 0.0, %v332
      %334 = vdwg.mxu0
      %v335 = vadd.f32 %v251, %v312
      %v336 = vadd.f32 %v252, %v315
      %v337 = vadd.f32 %v253, %v318
      %v338 = vadd.f32 %v254, %v321
      %v339 = vadd.f32 %v255, %v324
      %v340 = vadd.f32 %v256, %v327
      %v341 = vadd.f32 %v257, %v330
      %v342 = vadd.f32 %v258, %v333
      %s343 = scalar_lea.vmem %s165, 16
      %v344 = vld [vmem:[%s343] sm:$0xff]
      %v345 = vld [vmem:[%s343 + $0x10] sm:$0xff]
      %v346 = vld [vmem:[%s343 + $0x20] sm:$0xff]
      %v347 = vld [vmem:[%s343 + $0x30] sm:$0xff]
      %v348 = vld [vmem:[%s343 + $0x40] sm:$0xff]
      %v349 = vld [vmem:[%s343 + $0x50] sm:$0xff]
      %v350 = vld [vmem:[%s343 + $0x60] sm:$0xff]
      %v351 = vld [vmem:[%s343 + $0x70] sm:$0xff]
      %s352 = scalar_lea.vmem %s1, 32
      %v353 = vld [vmem:[%s352] sm:$0xff]
      %v354 = vld [vmem:[%s352 + $0x8] sm:$0xff]
      %v356 = vsel %vm185, %v344, 0
      %v359 = vsel %vm185, %v345, 0
      %v362 = vsel %vm185, %v346, 0
      %v365 = vsel %vm185, %v347, 0
      %v368 = vsel %vm185, %v348, 0
      %v371 = vsel %vm185, %v349, 0
      %v374 = vsel %vm185, %v350, 0
      %v377 = vsel %vm185, %v351, 0
      %379 = vmatpush.msra.mxu0 0.0
      %380 = vmatpush.msra.mxu0 0.0
      %381 = vmatpush.msra.mxu0 0.0
      %382 = vmatpush.msra.mxu0 0.0
      %383 = vmatpush.msra.mxu0 0.0
      %384 = vmatpush.msra.mxu0 0.0
      %385 = vmatpush.msra.mxu0 0.0
      %386 = vmatpush.msra.mxu0 0.0
      %387 = vmatpush.msra.mxu0 0.0
      %388 = vmatpush.msra.mxu0 0.0
      %389 = vmatpush.msra.mxu0 0.0
      %390 = vmatpush.msra.mxu0 0.0
      %391 = vmatpush.msra.mxu0 0.0
      %392 = vmatpush.msra.mxu0 0.0
      %393 = vmatpush.msra.mxu0 %v354
      %394 = vmatpush.msra.mxu0 %v353
      %395 = vmatmul.f32.gmra.mxu0 %v356
      %v396 = vpop.f32.mrf.mxu0
      %v397 = vadd.f32 0.0, %v396
      %398 = vmatmul.f32.gmra.mxu0 %v359
      %v399 = vpop.f32.mrf.mxu0
      %v400 = vadd.f32 0.0, %v399
      %401 = vmatmul.f32.gmra.mxu0 %v362
      %v402 = vpop.f32.mrf.mxu0
      %v403 = vadd.f32 0.0, %v402
      %404 = vmatmul.f32.gmra.mxu0 %v365
      %v405 = vpop.f32.mrf.mxu0
      %v406 = vadd.f32 0.0, %v405
      %407 = vmatmul.f32.gmra.mxu0 %v368
      %v408 = vpop.f32.mrf.mxu0
      %v409 = vadd.f32 0.0, %v408
      %410 = vmatmul.f32.gmra.mxu0 %v371
      %v411 = vpop.f32.mrf.mxu0
      %v412 = vadd.f32 0.0, %v411
      %413 = vmatmul.f32.gmra.mxu0 %v374
      %v414 = vpop.f32.mrf.mxu0
      %v415 = vadd.f32 0.0, %v414
      %416 = vmatmul.f32.gmra.mxu0 %v377
      %v417 = vpop.f32.mrf.mxu0
      %v418 = vadd.f32 0.0, %v417
      %419 = vdwg.mxu0
      %v420 = vadd.f32 %v335, %v397
      %v421 = vadd.f32 %v336, %v400
      %v422 = vadd.f32 %v337, %v403
      %v423 = vadd.f32 %v338, %v406
      %v424 = vadd.f32 %v339, %v409
      %v425 = vadd.f32 %v340, %v412
      %v426 = vadd.f32 %v341, %v415
      %v427 = vadd.f32 %v342, %v418
      %v428 = vld [vmem:[%s343 + $0x1] sm:$0xff]
      %v429 = vld [vmem:[%s343 + $0x11] sm:$0xff]
      %v430 = vld [vmem:[%s343 + $0x21] sm:$0xff]
      %v431 = vld [vmem:[%s343 + $0x31] sm:$0xff]
      %v432 = vld [vmem:[%s343 + $0x41] sm:$0xff]
      %v433 = vld [vmem:[%s343 + $0x51] sm:$0xff]
      %v434 = vld [vmem:[%s343 + $0x61] sm:$0xff]
      %v435 = vld [vmem:[%s343 + $0x71] sm:$0xff]
      %s436 = scalar_lea.vmem %s1, 48
      %v437 = vld [vmem:[%s436] sm:$0xff]
      %v438 = vld [vmem:[%s436 + $0x8] sm:$0xff]
      %v440 = vsel %vm185, %v428, 0
      %v443 = vsel %vm185, %v429, 0
      %v446 = vsel %vm185, %v430, 0
      %v449 = vsel %vm185, %v431, 0
      %v452 = vsel %vm185, %v432, 0
      %v455 = vsel %vm185, %v433, 0
      %v458 = vsel %vm185, %v434, 0
      %v461 = vsel %vm185, %v435, 0
      %463 = vmatpush.msra.mxu0 0.0
      %464 = vmatpush.msra.mxu0 0.0
      %465 = vmatpush.msra.mxu0 0.0
      %466 = vmatpush.msra.mxu0 0.0
      %467 = vmatpush.msra.mxu0 0.0
      %468 = vmatpush.msra.mxu0 0.0
      %469 = vmatpush.msra.mxu0 0.0
      %470 = vmatpush.msra.mxu0 0.0
      %471 = vmatpush.msra.mxu0 0.0
      %472 = vmatpush.msra.mxu0 0.0
      %473 = vmatpush.msra.mxu0 0.0
      %474 = vmatpush.msra.mxu0 0.0
      %475 = vmatpush.msra.mxu0 0.0
      %476 = vmatpush.msra.mxu0 0.0
      %477 = vmatpush.msra.mxu0 %v438
      %478 = vmatpush.msra.mxu0 %v437
      %479 = vmatmul.f32.gmra.mxu0 %v440
      %v480 = vpop.f32.mrf.mxu0
      %v481 = vadd.f32 0.0, %v480
      %482 = vmatmul.f32.gmra.mxu0 %v443
      %v483 = vpop.f32.mrf.mxu0
      %v484 = vadd.f32 0.0, %v483
      %485 = vmatmul.f32.gmra.mxu0 %v446
      %v486 = vpop.f32.mrf.mxu0
      %v487 = vadd.f32 0.0, %v486
      %488 = vmatmul.f32.gmra.mxu0 %v449
      %v489 = vpop.f32.mrf.mxu0
      %v490 = vadd.f32 0.0, %v489
      %491 = vmatmul.f32.gmra.mxu0 %v452
      %v492 = vpop.f32.mrf.mxu0
      %v493 = vadd.f32 0.0, %v492
      %494 = vmatmul.f32.gmra.mxu0 %v455
      %v495 = vpop.f32.mrf.mxu0
      %v496 = vadd.f32 0.0, %v495
      %497 = vmatmul.f32.gmra.mxu0 %v458
      %v498 = vpop.f32.mrf.mxu0
      %v499 = vadd.f32 0.0, %v498
      %500 = vmatmul.f32.gmra.mxu0 %v461
      %v501 = vpop.f32.mrf.mxu0
      %v502 = vadd.f32 0.0, %v501
      %503 = vdwg.mxu0
      %v504 = vadd.f32 %v420, %v481
      %v505 = vadd.f32 %v421, %v484
      %v506 = vadd.f32 %v422, %v487
      %v507 = vadd.f32 %v423, %v490
      %v508 = vadd.f32 %v424, %v493
      %v509 = vadd.f32 %v425, %v496
      %v510 = vadd.f32 %v426, %v499
      %v511 = vadd.f32 %v427, %v502
      %v512 = vmul.f32 %v504, 0.01
      %v513 = vmul.f32 %v505, 0.01
      %v514 = vmul.f32 %v506, 0.01
      %v515 = vmul.f32 %v507, 0.01
      %v516 = vmul.f32 %v508, 0.01
      %v517 = vmul.f32 %v509, 0.01
      %v518 = vmul.f32 %v510, 0.01
      %v519 = vmul.f32 %v511, 0.01
      %v520 = vmax.f32 %v504, %v512
      %v521 = vmax.f32 %v505, %v513
      %v522 = vmax.f32 %v506, %v514
      %v523 = vmax.f32 %v507, %v515
      %v524 = vmax.f32 %v508, %v516
      %v525 = vmax.f32 %v509, %v517
      %v526 = vmax.f32 %v510, %v518
      %v527 = vmax.f32 %v511, %v519
      %528 = vst [vmem:[%s170] sm:$0xff] %v520
      %529 = vst [vmem:[%s170 + $0x8] sm:$0xff] %v521
      %530 = vst [vmem:[%s170 + $0x10] sm:$0xff] %v522
      %531 = vst [vmem:[%s170 + $0x18] sm:$0xff] %v523
      %532 = vst [vmem:[%s170 + $0x20] sm:$0xff] %v524
      %533 = vst [vmem:[%s170 + $0x28] sm:$0xff] %v525
      %534 = vst [vmem:[%s170 + $0x30] sm:$0xff] %v526
      %535 = vst [vmem:[%s170 + $0x38] sm:$0xff] %v527
      %p536 = scmp.lt.s32.totalorder %s14, 1
      %s537 = scalar_select %p536, %s14, 1
      %s538 = smul.addr %s537, 8
      %s539 = smul.addr %s538, 8
      %s540 = scalar_lea.vmem %s3, %s539
      // Predicated region
      $region33: #{down_forward.1} parent=31 // pred_check
        %p541 = pneg %p100
      $region34: #{down_forward.1} parent=31 // pred_check_branch
        %543 = sbr.rel (%p541) target = $region36
      $region35: #{down_forward.1} parent=31 // pred_region
        _
      $region36: #{down_forward.1} parent=31 // pred_fallthru
        _
    $region32: #{down_forward.1} parent=5 // pred_fallthru
      _
    %p544 = scmp.le.s32.totalorder 2, %s9
    // Predicated region
    $region37: #{down_forward.1} parent=5 // pred_check
      %p545 = pneg %p544
    $region38: #{down_forward.1} parent=5 // pred_check_branch
      %547 = sbr.rel (%p545) target = $region40
    $region39: #{down_forward.1} parent=5 // pred_region
      %s548 = ssub.s32 %s9, 2
      // Predicated region
      $region41: #{down_forward.1} parent=39 // pred_check
        %p549 = pneg %p106
      $region42: #{down_forward.1} parent=39 // pred_check_branch
        %551 = sbr.rel (%p549) target = $region44
      $region43: #{down_forward.1} parent=39 // pred_region
        %p552 = scmp.lt.s32.totalorder %s15, 1
        %s553 = scalar_select %p552, %s15, 1
        %s554 = smul.addr %s553, 8
        %s555 = smul.addr %s554, 8
        %s556 = scalar_lea.vmem %s3, %s555
      $region44: #{down_forward.1} parent=39 // pred_fallthru
        _
    $region40: #{down_forward.1} parent=5 // pred_fallthru
      _
  $region6: #{down_forward.1} parent=0 // loop_footer
    %s13 = sadd.s32 1, %s9
  $region7: #{down_forward.1} parent=0 // loop_footer_branch
    %8 = sbr.rel target = $region3
  $region8: #{down_forward.1} parent=0 // loop_exit
    _

</llo_original>
